<compile_context>
chip_gen: v7x
topology: tpu7x:2x2x1
jax: 0.10.0
libtpu: 0.0.40
codegen_flags: <defaults>
</compile_context>

<pallas_src>
import functools

import jax
import jax.numpy as jnp
from jax.experimental import pallas as pl
from jax.experimental.pallas import tpu as pltpu


# ----------------------------------------------------------------------------
# Pallas kernel: full GatedGraphConv stack + GlobalAttention pooling.
# ----------------------------------------------------------------------------
def ggnn_kernel(adj_ref, x_ref, wcomb_ref, bcomb_ref, wg_ref, bg_ref,
                out_ref, tx_ref, *, num_layers, dim):
    D = dim
    adj = adj_ref[...]                       # [N, N]  bf16 edge-count adjacency
    x = x_ref[...]                           # [N, D]  f32 node state
    bcomb = bcomb_ref[...]                   # [1, 4D] f32 fused GRU biases

    # L=4 -> static unroll is fine.
    # TODO(synk): switch to lax.fori_loop with dynamic wcomb_ref[layer] indexing
    # if num_layers grows beyond ~8 (bounds vreg live ranges).
    for layer in range(num_layers):
        x_bf = x.astype(jnp.bfloat16)
        # Aggregation.  The per-layer GGNN weight is folded into wcomb, so the
        # GRU "input" contribution is  t @ (W_l @ WihT)  with  t = adj @ x.
        t = jnp.dot(adj, x_bf, preferred_element_type=jnp.float32)        # [N, D]

        # Fused GRU projection: single [N, 2D] @ [2D, 4D] matmul producing
        #   [:, 0:2D]  = (i_r + h_r | i_z + h_z)   (biases pre-summed)
        #   [:, 2D:3D] = i_n (+ b_in)
        #   [:, 3D:4D] = h_n (+ b_hn)
        tx_ref[:, :D] = t.astype(jnp.bfloat16)
        tx_ref[:, D:] = x_bf
        g = jnp.dot(tx_ref[...], wcomb_ref[layer],
                    preferred_element_type=jnp.float32) + bcomb           # [N, 4D]

        rz = jax.nn.sigmoid(g[:, :2 * D])
        r = rz[:, :D]
        z = rz[:, D:2 * D]
        n = jnp.tanh(g[:, 2 * D:3 * D] + r * g[:, 3 * D:4 * D])
        x = (1.0 - z) * n + z * x

    # GlobalAttention pooling over the single graph (batch == 0 for every node):
    #   gate = sigmoid(Linear(x)) -> softmax over nodes -> weighted node sum.
    # Gate logits are produced directly in a lane-dense [1, N] row (q@k.T-style
    # contraction) so the softmax reduces over lanes and the weighted sum is a
    # single [1, N] @ [N, D] MXU matmul with a lane-dense [1, D] result.
    x_bf = x.astype(jnp.bfloat16)
    logits = jnp.einsum('od,nd->on', wg_ref[...], x_bf,
                        preferred_element_type=jnp.float32) + bg_ref[0, 0]  # [1, N]
    gate = jax.nn.sigmoid(logits)
    gate = gate - jnp.max(gate, axis=-1, keepdims=True)
    e = jnp.exp(gate)
    attn = e * pl.reciprocal(jnp.sum(e, axis=-1, keepdims=True), approx=True)
    out_ref[...] = jnp.dot(attn.astype(jnp.bfloat16), x_bf,
                           preferred_element_type=jnp.float32)              # [1, D]


# ----------------------------------------------------------------------------
# Wrapper: embedding lookups + dense adjacency + weight folding (glue),
# then the fused kernel.
# ----------------------------------------------------------------------------
def ggnn_forward(x_tokens, edge_index, edge_attr, params, num_layers):
    L = num_layers
    D = params["embed"].shape[1]

    # nn.Embedding(vocablen, D) lookup, then squeeze(1):  [N,1] -> [N,D]
    x0 = jnp.take(params["embed"], x_tokens[:, 0], axis=0).astype(jnp.float32)

    # edge_embed lookup: computed but unused, exactly as in the PyTorch module
    # (ggnnlayer is called without edge_weight).
    if edge_attr is not None:
        _ = jnp.take(params["edge_embed"], edge_attr[:, 0], axis=0)

    N = x0.shape[0]
    # Dense adjacency for add-aggregation: A[dst, src] += 1 per edge.  Integer
    # edge counts are exact in bf16 (up to 256 parallel edges).
    adj = jnp.zeros((N, N), jnp.float32)
    adj = adj.at[edge_index[1], edge_index[0]].add(1.0).astype(jnp.bfloat16)
    # TODO(synk): for large graphs (N >= ~2k) tile adj over dst-row blocks with a
    # grid + BlockSpec (v7x only has 64 MiB VMEM), or switch to an edge-list
    # segment-sum; a 16-node graph trivially fits fully resident.

    # Fold the per-layer GGNN weight into the GRU input projection:
    #   (adj @ (x @ W_l)) @ WihT == (adj @ x) @ (W_l @ WihT)
    wih_t = params["gru_wih_T"]                                          # [D, 3D]
    whh_t = params["gru_whh_T"]                                          # [D, 3D]
    wc = jnp.einsum('lde,ef->ldf', params["ggnn_weight"], wih_t)         # [L, D, 3D]

    # Fused GRU weight [L, 2D, 4D]:
    #   rows 0:D  (input = t = adj@x): [Wc_r | Wc_z | Wc_n | 0   ]
    #   rows D:2D (input = x hidden):  [Wh_r | Wh_z | 0    | Wh_n]
    zeros = jnp.zeros((L, D, D), jnp.float32)
    whh_b = jnp.broadcast_to(whh_t, (L, D, 3 * D))
    top = jnp.concatenate([wc[:, :, :2 * D], wc[:, :, 2 * D:], zeros], axis=2)
    bot = jnp.concatenate([whh_b[:, :, :2 * D], zeros, whh_b[:, :, 2 * D:]], axis=2)
    wcomb = jnp.concatenate([top, bot], axis=1).astype(jnp.bfloat16)     # [L, 2D, 4D]

    bih, bhh = params["gru_bih"], params["gru_bhh"]                      # [1, 3D]
    bcomb = jnp.concatenate([bih[:, :2 * D] + bhh[:, :2 * D],
                             bih[:, 2 * D:], bhh[:, 2 * D:]], axis=1)    # [1, 4D]

    wg = params["gate_w"].astype(jnp.bfloat16)                           # [1, D]
    bg = params["gate_b"]                                                # [1, 1]

    kernel = functools.partial(ggnn_kernel, num_layers=L, dim=D)
    vmem = pl.BlockSpec(memory_space=pltpu.MemorySpace.VMEM)
    smem = pl.BlockSpec(memory_space=pltpu.MemorySpace.SMEM)

    return pl.pallas_call(
        kernel,
        out_shape=jax.ShapeDtypeStruct((1, D), jnp.float32),
        in_specs=[vmem, vmem, vmem, vmem, vmem, smem],
        out_specs=vmem,
        scratch_shapes=[pltpu.VMEM((N, 2 * D), jnp.bfloat16)],
    )(adj, x0, wcomb, bcomb, wg, bg)


# ----------------------------------------------------------------------------
# Deterministic parameter construction (synthetic, mirrors module __init__).
# ----------------------------------------------------------------------------
def make_params(key, vocablen, embedding_dim, num_layers):
    D = embedding_dim
    ks = jax.random.split(key, 9)
    scale = 0.2
    return {
        "embed": scale * jax.random.normal(ks[0], (vocablen, D), jnp.float32),
        "edge_embed": scale * jax.random.normal(ks[1], (20, D), jnp.float32),
        "ggnn_weight": scale * jax.random.normal(ks[2], (num_layers, D, D), jnp.float32),
        "gru_wih_T": scale * jax.random.normal(ks[3], (D, 3 * D), jnp.float32),
        "gru_whh_T": scale * jax.random.normal(ks[4], (D, 3 * D), jnp.float32),
        "gru_bih": scale * jax.random.normal(ks[5], (1, 3 * D), jnp.float32),
        "gru_bhh": scale * jax.random.normal(ks[6], (1, 3 * D), jnp.float32),
        "gate_w": scale * jax.random.normal(ks[7], (1, D), jnp.float32),   # torch Linear(D,1).weight layout
        "gate_b": scale * jax.random.normal(ks[8], (1, 1), jnp.float32),
    }


if __name__ == "__main__":
    VOCAB = 50
    DIM = 32
    NUM_LAYERS = 4
    N_NODES = 16
    N_EDGES = 40

    key = jax.random.PRNGKey(0)
    k_par, k_x, k_src, k_dst, k_ea = jax.random.split(key, 5)

    params = make_params(k_par, VOCAB, DIM, NUM_LAYERS)

    # data = (x, edge_index, edge_attr)
    x_tokens = jax.random.randint(k_x, (N_NODES, 1), 0, VOCAB, dtype=jnp.int32)
    src = jax.random.randint(k_src, (N_EDGES,), 0, N_NODES, dtype=jnp.int32)
    dst = jax.random.randint(k_dst, (N_EDGES,), 0, N_NODES, dtype=jnp.int32)
    edge_index = jnp.stack([src, dst], axis=0)                       # [2, E]
    edge_attr = jax.random.randint(k_ea, (N_EDGES, 1), 0, 20, dtype=jnp.int32)

    hg = ggnn_forward(x_tokens, edge_index, edge_attr, params, NUM_LAYERS)
    hg = jax.block_until_ready(hg)

    assert hg.shape == (1, DIM) and hg.dtype == jnp.float32
    assert bool(jnp.all(jnp.isfinite(hg)))
    print("KERNEL_OK")
</pallas_src>

<mosaic_0001>
module attributes {stable_mosaic.version = 11 : i64} {
  func.func @ggnn_kernel(%arg0: memref<16x16xbf16, #tpu.memory_space<vmem>>, %arg1: memref<16x32xf32, #tpu.memory_space<vmem>>, %arg2: memref<4x64x128xbf16, #tpu.memory_space<vmem>>, %arg3: memref<1x128xf32, #tpu.memory_space<vmem>>, %arg4: memref<1x32xbf16, #tpu.memory_space<vmem>>, %arg5: memref<1x1xf32, #tpu.memory_space<smem>>, %arg6: memref<1x32xf32, #tpu.memory_space<vmem>>, %arg7: memref<16x64xbf16, #tpu.memory_space<vmem>>) attributes {dimension_semantics = [], scalar_prefetch = 0 : i64, scratch_operands = 1 : i64, tpu.core_type = #tpu.core_type<tc>} {
    %c0 = arith.constant 0 : index
    %c0_0 = arith.constant 0 : index
    %0 = vector.load %arg0[%c0, %c0_0] : memref<16x16xbf16, #tpu.memory_space<vmem>>, vector<16x16xbf16>
    %c0_1 = arith.constant 0 : index
    %c0_2 = arith.constant 0 : index
    %1 = vector.load %arg1[%c0_1, %c0_2] : memref<16x32xf32, #tpu.memory_space<vmem>>, vector<16x32xf32>
    %c0_3 = arith.constant 0 : index
    %c0_4 = arith.constant 0 : index
    %2 = vector.load %arg3[%c0_3, %c0_4] : memref<1x128xf32, #tpu.memory_space<vmem>>, vector<1x128xf32>
    %3 = arith.truncf %1 : vector<16x32xf32> to vector<16x32xbf16>
    %cst = arith.constant dense<0.000000e+00> : vector<16x32xf32>
    %4 = tpu.matmul %0, %3, %cst {dimension_numbers = #tpu.dot_dimension_numbers<[1], [0], [0], [1], [0, 0, 1, 1], [], []>} : vector<16x16xbf16>, vector<16x32xbf16>, vector<16x32xf32> -> vector<16x32xf32>
    %5 = arith.truncf %4 : vector<16x32xf32> to vector<16x32xbf16>
    %c0_5 = arith.constant 0 : index
    %c0_6 = arith.constant 0 : index
    %6 = vector.load %arg7[%c0_5, %c0_6] : memref<16x64xbf16, #tpu.memory_space<vmem>>, vector<16x32xbf16>
    tpu.vector_store %arg7[%c0_5, %c0_6], %5 {strides = array<i32>} : memref<16x64xbf16, #tpu.memory_space<vmem>>, vector<16x32xbf16>,
    %c0_7 = arith.constant 0 : index
    %c32 = arith.constant 32 : index
    %7 = vector.load %arg7[%c0_7, %c32] : memref<16x64xbf16, #tpu.memory_space<vmem>>, vector<16x32xbf16>
    tpu.vector_store %arg7[%c0_7, %c32], %3 {strides = array<i32>} : memref<16x64xbf16, #tpu.memory_space<vmem>>, vector<16x32xbf16>,
    %c0_8 = arith.constant 0 : index
    %c0_9 = arith.constant 0 : index
    %8 = vector.load %arg7[%c0_8, %c0_9] : memref<16x64xbf16, #tpu.memory_space<vmem>>, vector<16x64xbf16>
    %c0_10 = arith.constant 0 : index
    %c0_11 = arith.constant 0 : index
    %c0_12 = arith.constant 0 : index
    %9 = vector.load %arg2[%c0_10, %c0_11, %c0_12] : memref<4x64x128xbf16, #tpu.memory_space<vmem>>, vector<1x64x128xbf16>
    %10 = vector.shape_cast %9 : vector<1x64x128xbf16> to vector<64x128xbf16>
    %cst_13 = arith.constant dense<0.000000e+00> : vector<16x128xf32>
    %11 = tpu.matmul %8, %10, %cst_13 {dimension_numbers = #tpu.dot_dimension_numbers<[1], [0], [0], [1], [0, 0, 1, 1], [], []>} : vector<16x64xbf16>, vector<64x128xbf16>, vector<16x128xf32> -> vector<16x128xf32>
    %12 = vector.broadcast %2 : vector<1x128xf32> to vector<16x128xf32>
    %13 = arith.addf %11, %12 : vector<16x128xf32>
    %14 = vector.extract_strided_slice %13 {offsets = [0, 0], sizes = [16, 64], strides = [1, 1]} : vector<16x128xf32> to vector<16x64xf32>
    %15 = arith.negf %14 : vector<16x64xf32>
    %16 = math.exp %15 : vector<16x64xf32>
    %cst_14 = arith.constant 1.000000e+00 : f32
    %17 = vector.broadcast %cst_14 : f32 to vector<16x64xf32>
    %18 = arith.addf %17, %16 : vector<16x64xf32>
    %19 = arith.divf %17, %18 : vector<16x64xf32>
    %20 = vector.extract_strided_slice %19 {offsets = [0, 0], sizes = [16, 32], strides = [1, 1]} : vector<16x64xf32> to vector<16x32xf32>
    %21 = vector.extract_strided_slice %19 {offsets = [0, 32], sizes = [16, 32], strides = [1, 1]} : vector<16x64xf32> to vector<16x32xf32>
    %22 = vector.extract_strided_slice %13 {offsets = [0, 64], sizes = [16, 32], strides = [1, 1]} : vector<16x128xf32> to vector<16x32xf32>
    %23 = vector.extract_strided_slice %13 {offsets = [0, 96], sizes = [16, 32], strides = [1, 1]} : vector<16x128xf32> to vector<16x32xf32>
    %24 = arith.mulf %20, %23 : vector<16x32xf32>
    %25 = arith.addf %22, %24 : vector<16x32xf32>
    %26 = math.tanh %25 : vector<16x32xf32>
    %cst_15 = arith.constant 1.000000e+00 : f32
    %27 = vector.broadcast %cst_15 : f32 to vector<16x32xf32>
    %28 = arith.subf %27, %21 : vector<16x32xf32>
    %29 = arith.mulf %28, %26 : vector<16x32xf32>
    %30 = arith.mulf %21, %1 : vector<16x32xf32>
    %31 = arith.addf %29, %30 : vector<16x32xf32>
    %32 = arith.truncf %31 : vector<16x32xf32> to vector<16x32xbf16>
    %cst_16 = arith.constant dense<0.000000e+00> : vector<16x32xf32>
    %33 = tpu.matmul %0, %32, %cst_16 {dimension_numbers = #tpu.dot_dimension_numbers<[1], [0], [0], [1], [0, 0, 1, 1], [], []>} : vector<16x16xbf16>, vector<16x32xbf16>, vector<16x32xf32> -> vector<16x32xf32>
    %34 = arith.truncf %33 : vector<16x32xf32> to vector<16x32xbf16>
    %c0_17 = arith.constant 0 : index
    %c0_18 = arith.constant 0 : index
    %35 = vector.load %arg7[%c0_17, %c0_18] : memref<16x64xbf16, #tpu.memory_space<vmem>>, vector<16x32xbf16>
    tpu.vector_store %arg7[%c0_17, %c0_18], %34 {strides = array<i32>} : memref<16x64xbf16, #tpu.memory_space<vmem>>, vector<16x32xbf16>,
    %c0_19 = arith.constant 0 : index
    %c32_20 = arith.constant 32 : index
    %36 = vector.load %arg7[%c0_19, %c32_20] : memref<16x64xbf16, #tpu.memory_space<vmem>>, vector<16x32xbf16>
    tpu.vector_store %arg7[%c0_19, %c32_20], %32 {strides = array<i32>} : memref<16x64xbf16, #tpu.memory_space<vmem>>, vector<16x32xbf16>,
    %c0_21 = arith.constant 0 : index
    %c0_22 = arith.constant 0 : index
    %37 = vector.load %arg7[%c0_21, %c0_22] : memref<16x64xbf16, #tpu.memory_space<vmem>>, vector<16x64xbf16>
    %c1 = arith.constant 1 : index
    %c0_23 = arith.constant 0 : index
    %c0_24 = arith.constant 0 : index
    %38 = vector.load %arg2[%c1, %c0_23, %c0_24] : memref<4x64x128xbf16, #tpu.memory_space<vmem>>, vector<1x64x128xbf16>
    %39 = vector.shape_cast %38 : vector<1x64x128xbf16> to vector<64x128xbf16>
    %cst_25 = arith.constant dense<0.000000e+00> : vector<16x128xf32>
    %40 = tpu.matmul %37, %39, %cst_25 {dimension_numbers = #tpu.dot_dimension_numbers<[1], [0], [0], [1], [0, 0, 1, 1], [], []>} : vector<16x64xbf16>, vector<64x128xbf16>, vector<16x128xf32> -> vector<16x128xf32>
    %41 = vector.broadcast %2 : vector<1x128xf32> to vector<16x128xf32>
    %42 = arith.addf %40, %41 : vector<16x128xf32>
    %43 = vector.extract_strided_slice %42 {offsets = [0, 0], sizes = [16, 64], strides = [1, 1]} : vector<16x128xf32> to vector<16x64xf32>
    %44 = arith.negf %43 : vector<16x64xf32>
    %45 = math.exp %44 : vector<16x64xf32>
    %cst_26 = arith.constant 1.000000e+00 : f32
    %46 = vector.broadcast %cst_26 : f32 to vector<16x64xf32>
    %47 = arith.addf %46, %45 : vector<16x64xf32>
    %48 = arith.divf %46, %47 : vector<16x64xf32>
    %49 = vector.extract_strided_slice %48 {offsets = [0, 0], sizes = [16, 32], strides = [1, 1]} : vector<16x64xf32> to vector<16x32xf32>
    %50 = vector.extract_strided_slice %48 {offsets = [0, 32], sizes = [16, 32], strides = [1, 1]} : vector<16x64xf32> to vector<16x32xf32>
    %51 = vector.extract_strided_slice %42 {offsets = [0, 64], sizes = [16, 32], strides = [1, 1]} : vector<16x128xf32> to vector<16x32xf32>
    %52 = vector.extract_strided_slice %42 {offsets = [0, 96], sizes = [16, 32], strides = [1, 1]} : vector<16x128xf32> to vector<16x32xf32>
    %53 = arith.mulf %49, %52 : vector<16x32xf32>
    %54 = arith.addf %51, %53 : vector<16x32xf32>
    %55 = math.tanh %54 : vector<16x32xf32>
    %cst_27 = arith.constant 1.000000e+00 : f32
    %56 = vector.broadcast %cst_27 : f32 to vector<16x32xf32>
    %57 = arith.subf %56, %50 : vector<16x32xf32>
    %58 = arith.mulf %57, %55 : vector<16x32xf32>
    %59 = arith.mulf %50, %31 : vector<16x32xf32>
    %60 = arith.addf %58, %59 : vector<16x32xf32>
    %61 = arith.truncf %60 : vector<16x32xf32> to vector<16x32xbf16>
    %cst_28 = arith.constant dense<0.000000e+00> : vector<16x32xf32>
    %62 = tpu.matmul %0, %61, %cst_28 {dimension_numbers = #tpu.dot_dimension_numbers<[1], [0], [0], [1], [0, 0, 1, 1], [], []>} : vector<16x16xbf16>, vector<16x32xbf16>, vector<16x32xf32> -> vector<16x32xf32>
    %63 = arith.truncf %62 : vector<16x32xf32> to vector<16x32xbf16>
    %c0_29 = arith.constant 0 : index
    %c0_30 = arith.constant 0 : index
    %64 = vector.load %arg7[%c0_29, %c0_30] : memref<16x64xbf16, #tpu.memory_space<vmem>>, vector<16x32xbf16>
    tpu.vector_store %arg7[%c0_29, %c0_30], %63 {strides = array<i32>} : memref<16x64xbf16, #tpu.memory_space<vmem>>, vector<16x32xbf16>,
    %c0_31 = arith.constant 0 : index
    %c32_32 = arith.constant 32 : index
    %65 = vector.load %arg7[%c0_31, %c32_32] : memref<16x64xbf16, #tpu.memory_space<vmem>>, vector<16x32xbf16>
    tpu.vector_store %arg7[%c0_31, %c32_32], %61 {strides = array<i32>} : memref<16x64xbf16, #tpu.memory_space<vmem>>, vector<16x32xbf16>,
    %c0_33 = arith.constant 0 : index
    %c0_34 = arith.constant 0 : index
    %66 = vector.load %arg7[%c0_33, %c0_34] : memref<16x64xbf16, #tpu.memory_space<vmem>>, vector<16x64xbf16>
    %c2 = arith.constant 2 : index
    %c0_35 = arith.constant 0 : index
    %c0_36 = arith.constant 0 : index
    %67 = vector.load %arg2[%c2, %c0_35, %c0_36] : memref<4x64x128xbf16, #tpu.memory_space<vmem>>, vector<1x64x128xbf16>
    %68 = vector.shape_cast %67 : vector<1x64x128xbf16> to vector<64x128xbf16>
    %cst_37 = arith.constant dense<0.000000e+00> : vector<16x128xf32>
    %69 = tpu.matmul %66, %68, %cst_37 {dimension_numbers = #tpu.dot_dimension_numbers<[1], [0], [0], [1], [0, 0, 1, 1], [], []>} : vector<16x64xbf16>, vector<64x128xbf16>, vector<16x128xf32> -> vector<16x128xf32>
    %70 = vector.broadcast %2 : vector<1x128xf32> to vector<16x128xf32>
    %71 = arith.addf %69, %70 : vector<16x128xf32>
    %72 = vector.extract_strided_slice %71 {offsets = [0, 0], sizes = [16, 64], strides = [1, 1]} : vector<16x128xf32> to vector<16x64xf32>
    %73 = arith.negf %72 : vector<16x64xf32>
    %74 = math.exp %73 : vector<16x64xf32>
    %cst_38 = arith.constant 1.000000e+00 : f32
    %75 = vector.broadcast %cst_38 : f32 to vector<16x64xf32>
    %76 = arith.addf %75, %74 : vector<16x64xf32>
    %77 = arith.divf %75, %76 : vector<16x64xf32>
    %78 = vector.extract_strided_slice %77 {offsets = [0, 0], sizes = [16, 32], strides = [1, 1]} : vector<16x64xf32> to vector<16x32xf32>
    %79 = vector.extract_strided_slice %77 {offsets = [0, 32], sizes = [16, 32], strides = [1, 1]} : vector<16x64xf32> to vector<16x32xf32>
    %80 = vector.extract_strided_slice %71 {offsets = [0, 64], sizes = [16, 32], strides = [1, 1]} : vector<16x128xf32> to vector<16x32xf32>
    %81 = vector.extract_strided_slice %71 {offsets = [0, 96], sizes = [16, 32], strides = [1, 1]} : vector<16x128xf32> to vector<16x32xf32>
    %82 = arith.mulf %78, %81 : vector<16x32xf32>
    %83 = arith.addf %80, %82 : vector<16x32xf32>
    %84 = math.tanh %83 : vector<16x32xf32>
    %cst_39 = arith.constant 1.000000e+00 : f32
    %85 = vector.broadcast %cst_39 : f32 to vector<16x32xf32>
    %86 = arith.subf %85, %79 : vector<16x32xf32>
    %87 = arith.mulf %86, %84 : vector<16x32xf32>
    %88 = arith.mulf %79, %60 : vector<16x32xf32>
    %89 = arith.addf %87, %88 : vector<16x32xf32>
    %90 = arith.truncf %89 : vector<16x32xf32> to vector<16x32xbf16>
    %cst_40 = arith.constant dense<0.000000e+00> : vector<16x32xf32>
    %91 = tpu.matmul %0, %90, %cst_40 {dimension_numbers = #tpu.dot_dimension_numbers<[1], [0], [0], [1], [0, 0, 1, 1], [], []>} : vector<16x16xbf16>, vector<16x32xbf16>, vector<16x32xf32> -> vector<16x32xf32>
    %92 = arith.truncf %91 : vector<16x32xf32> to vector<16x32xbf16>
    %c0_41 = arith.constant 0 : index
    %c0_42 = arith.constant 0 : index
    %93 = vector.load %arg7[%c0_41, %c0_42] : memref<16x64xbf16, #tpu.memory_space<vmem>>, vector<16x32xbf16>
    tpu.vector_store %arg7[%c0_41, %c0_42], %92 {strides = array<i32>} : memref<16x64xbf16, #tpu.memory_space<vmem>>, vector<16x32xbf16>,
    %c0_43 = arith.constant 0 : index
    %c32_44 = arith.constant 32 : index
    %94 = vector.load %arg7[%c0_43, %c32_44] : memref<16x64xbf16, #tpu.memory_space<vmem>>, vector<16x32xbf16>
    tpu.vector_store %arg7[%c0_43, %c32_44], %90 {strides = array<i32>} : memref<16x64xbf16, #tpu.memory_space<vmem>>, vector<16x32xbf16>,
    %c0_45 = arith.constant 0 : index
    %c0_46 = arith.constant 0 : index
    %95 = vector.load %arg7[%c0_45, %c0_46] : memref<16x64xbf16, #tpu.memory_space<vmem>>, vector<16x64xbf16>
    %c3 = arith.constant 3 : index
    %c0_47 = arith.constant 0 : index
    %c0_48 = arith.constant 0 : index
    %96 = vector.load %arg2[%c3, %c0_47, %c0_48] : memref<4x64x128xbf16, #tpu.memory_space<vmem>>, vector<1x64x128xbf16>
    %97 = vector.shape_cast %96 : vector<1x64x128xbf16> to vector<64x128xbf16>
    %cst_49 = arith.constant dense<0.000000e+00> : vector<16x128xf32>
    %98 = tpu.matmul %95, %97, %cst_49 {dimension_numbers = #tpu.dot_dimension_numbers<[1], [0], [0], [1], [0, 0, 1, 1], [], []>} : vector<16x64xbf16>, vector<64x128xbf16>, vector<16x128xf32> -> vector<16x128xf32>
    %99 = vector.broadcast %2 : vector<1x128xf32> to vector<16x128xf32>
    %100 = arith.addf %98, %99 : vector<16x128xf32>
    %101 = vector.extract_strided_slice %100 {offsets = [0, 0], sizes = [16, 64], strides = [1, 1]} : vector<16x128xf32> to vector<16x64xf32>
    %102 = arith.negf %101 : vector<16x64xf32>
    %103 = math.exp %102 : vector<16x64xf32>
    %cst_50 = arith.constant 1.000000e+00 : f32
    %104 = vector.broadcast %cst_50 : f32 to vector<16x64xf32>
    %105 = arith.addf %104, %103 : vector<16x64xf32>
    %106 = arith.divf %104, %105 : vector<16x64xf32>
    %107 = vector.extract_strided_slice %106 {offsets = [0, 0], sizes = [16, 32], strides = [1, 1]} : vector<16x64xf32> to vector<16x32xf32>
    %108 = vector.extract_strided_slice %106 {offsets = [0, 32], sizes = [16, 32], strides = [1, 1]} : vector<16x64xf32> to vector<16x32xf32>
    %109 = vector.extract_strided_slice %100 {offsets = [0, 64], sizes = [16, 32], strides = [1, 1]} : vector<16x128xf32> to vector<16x32xf32>
    %110 = vector.extract_strided_slice %100 {offsets = [0, 96], sizes = [16, 32], strides = [1, 1]} : vector<16x128xf32> to vector<16x32xf32>
    %111 = arith.mulf %107, %110 : vector<16x32xf32>
    %112 = arith.addf %109, %111 : vector<16x32xf32>
    %113 = math.tanh %112 : vector<16x32xf32>
    %cst_51 = arith.constant 1.000000e+00 : f32
    %114 = vector.broadcast %cst_51 : f32 to vector<16x32xf32>
    %115 = arith.subf %114, %108 : vector<16x32xf32>
    %116 = arith.mulf %115, %113 : vector<16x32xf32>
    %117 = arith.mulf %108, %89 : vector<16x32xf32>
    %118 = arith.addf %116, %117 : vector<16x32xf32>
    %119 = arith.truncf %118 : vector<16x32xf32> to vector<16x32xbf16>
    %c0_52 = arith.constant 0 : index
    %c0_53 = arith.constant 0 : index
    %120 = vector.load %arg4[%c0_52, %c0_53] : memref<1x32xbf16, #tpu.memory_space<vmem>>, vector<1x32xbf16>
    "tpu.trace_start"() <{level = 10 : i32, message = "od,nd->on"}> : () -> ()
    %cst_54 = arith.constant dense<0.000000e+00> : vector<1x16xf32>
    %121 = tpu.matmul %120, %119, %cst_54 {dimension_numbers = #tpu.dot_dimension_numbers<[1], [1], [0], [0], [0, 0, 1, 0], [], []>} : vector<1x32xbf16>, vector<16x32xbf16>, vector<1x16xf32> -> vector<1x16xf32>
    "tpu.trace_stop"() : () -> ()
    %c0_55 = arith.constant 0 : index
    %c0_56 = arith.constant 0 : index
    %122 = memref.load %arg5[%c0_55, %c0_56] : memref<1x1xf32, #tpu.memory_space<smem>>
    %123 = vector.broadcast %122 : f32 to vector<1x16xf32>
    %124 = arith.addf %121, %123 : vector<1x16xf32>
    %125 = arith.negf %124 : vector<1x16xf32>
    %126 = math.exp %125 : vector<1x16xf32>
    %cst_57 = arith.constant 1.000000e+00 : f32
    %127 = vector.broadcast %cst_57 : f32 to vector<1x16xf32>
    %128 = arith.addf %127, %126 : vector<1x16xf32>
    %129 = arith.divf %127, %128 : vector<1x16xf32>
    %cst_58 = arith.constant dense<0xFF800000> : vector<1xf32>
    %130 = vector.multi_reduction <maximumf>, %129, %cst_58 [1] : vector<1x16xf32> to vector<1xf32>
    %131 = vector.shape_cast %130 : vector<1xf32> to vector<1x1xf32>
    %132 = vector.broadcast %131 : vector<1x1xf32> to vector<1x16xf32>
    %133 = arith.subf %129, %132 : vector<1x16xf32>
    %134 = math.exp %133 : vector<1x16xf32>
    %cst_59 = arith.constant dense<0.000000e+00> : vector<1xf32>
    %135 = vector.multi_reduction <add>, %134, %cst_59 [1] : vector<1x16xf32> to vector<1xf32>
    %136 = vector.shape_cast %135 : vector<1xf32> to vector<1x1xf32>
    %137 = tpu.reciprocal %136 {approx = true} : vector<1x1xf32> -> vector<1x1xf32>
    %138 = vector.broadcast %137 : vector<1x1xf32> to vector<1x16xf32>
    %139 = arith.mulf %134, %138 : vector<1x16xf32>
    %140 = arith.truncf %139 : vector<1x16xf32> to vector<1x16xbf16>
    %cst_60 = arith.constant dense<0.000000e+00> : vector<1x32xf32>
    %141 = tpu.matmul %140, %119, %cst_60 {dimension_numbers = #tpu.dot_dimension_numbers<[1], [0], [0], [1], [0, 0, 1, 1], [], []>} : vector<1x16xbf16>, vector<16x32xbf16>, vector<1x32xf32> -> vector<1x32xf32>
    %c0_61 = arith.constant 0 : index
    %c0_62 = arith.constant 0 : index
    %142 = vector.load %arg6[%c0_61, %c0_62] : memref<1x32xf32, #tpu.memory_space<vmem>>, vector<1x32xf32>
    tpu.vector_store %arg6[%c0_61, %c0_62], %141 {strides = array<i32>} : memref<1x32xf32, #tpu.memory_space<vmem>>, vector<1x32xf32>,
    return
  }
}

</mosaic_0001>

<llo_original>
// kernel: tpu_custom_call.1
$region0: #{tpu_custom_call.1}
  #allocation0 [shape = 'u32[]', space=smem, size = 0x4, offset = 0x4, fixed_abs, tag = 'smem constant byte address 0x4 - core index']
  #allocation1 [shape = 'u32[144,128]{1,0:T(1,128)}', space=vmem, size = 0x12000, scoped, tag = 'internal scratch']
  #allocation2 [shape = 'bf16[16,64]{1,0:T(16,128)(2,1)}', space=vmem, size = 0x1000, scoped, tag = 'scratch operand']
  #allocation3 [shape = 'f32[1,1]{1,0:T(1,128)S(6)}', space=smem, size = 0x200, scoped, tag = 'scoped memory for tpu_custom_call.1']
  %s0 = inlined_call_operand.hbm [shape: bf16[16,16], index: 0, kind: input, shape index: {}]
  %s1 = inlined_call_operand.hbm [shape: f32[16,32], index: 1, kind: input, shape index: {}]
  %s2 = inlined_call_operand.hbm [shape: bf16[4,64,128], index: 2, kind: input, shape index: {}]
  %s3 = inlined_call_operand.vmem [shape: f32[1,128], index: 3, kind: input, shape index: {}]
  %s4 = inlined_call_operand.vmem [shape: bf16[1,32], index: 4, kind: input, shape index: {}]
  %s5 = inlined_call_operand.<no memory space> [shape: f32[1,1], index: 5, kind: input, shape index: {}]
  %s6 = inlined_call_operand.hbm [shape: f32[1,32], index: 6, kind: output, shape index: {}]
  %s7 = sld [smem:[#allocation0]]
  $region46: #{tpu_custom_call.1} parent=0
    _
  %s9 = ssub.s32 1, %s7
  %s10 = scalar_select 0, %s9, %s7
  %11 = sst [smem:[#allocation3]] %s5
  $region1: #{tpu_custom_call.1} parent=0
    #allocation4 [shape = 'u8[4096]{0}', space=vmem, size = 0x1000, scoped, tag = 'input window, operand 0, single buffered']
    #allocation5 [shape = 's32[1]{0}', space=sflag, size = 0x4, scoped, tag = 'scoped memory for tpu_custom_call.1']
    #allocation6 [shape = 's32[1]{0}', space=sflag, size = 0x4, scoped, tag = 'scoped memory for tpu_custom_call.1']
    #allocation7 [shape = 'u8[8192]{0}', space=vmem, size = 0x2000, scoped, tag = 'input window, operand 1, single buffered']
    #allocation8 [shape = 's32[1]{0}', space=sflag, size = 0x4, scoped, tag = 'scoped memory for tpu_custom_call.1']
    #allocation9 [shape = 'u8[65536]{0}', space=vmem, size = 0x10000, scoped, tag = 'input window, operand 2, single buffered']
    #allocation10 [shape = 'u8[512]{0}', space=vmem, size = 0x400, scoped, tag = 'output window, operand 0, single buffered']
    %12 = vsyncpa [#allocation5], 0
    %13 = vsyncpa [#allocation8], 0
    %14 = vsyncpa [#allocation6], 0
    // Predicated region
    $region2: #{tpu_custom_call.1} parent=1 // pred_check
      _
    $region3: #{tpu_custom_call.1} parent=1 // pred_check_branch
      %16 = sbr.rel (0) target = $region5
    $region4: #{tpu_custom_call.1} parent=1 // pred_region
      %s18 = ssub.s32 128, 128
      %19 = vsyncadd [#allocation5], %s18
      %s20 = sshll.u32 [#allocation4], 4
      %s21 = int_to_ptr.vmem [resolvable:$true] %s20
      %26 = dma.hbm_to_vmem [thread:$0]  %s0, 128, %s21, [#allocation5], 64, 64, 4
    $region5: #{tpu_custom_call.1} parent=1 // pred_fallthru
      _
    // Predicated region
    $region6: #{tpu_custom_call.1} parent=1 // pred_check
      _
    $region7: #{tpu_custom_call.1} parent=1 // pred_check_branch
      %28 = sbr.rel (0) target = $region9
    $region8: #{tpu_custom_call.1} parent=1 // pred_region
      %s30 = ssub.s32 256, 256
      %31 = vsyncadd [#allocation8], %s30
      %s32 = sshll.u32 [#allocation7], 4
      %s33 = int_to_ptr.vmem [resolvable:$true] %s32
      %38 = dma.hbm_to_vmem [thread:$0]  %s1, 256, %s33, [#allocation8], 128, 128, 8
    $region9: #{tpu_custom_call.1} parent=1 // pred_fallthru
      _
    // Predicated region
    $region10: #{tpu_custom_call.1} parent=1 // pred_check
      _
    $region11: #{tpu_custom_call.1} parent=1 // pred_check_branch
      %40 = sbr.rel (0) target = $region13
    $region12: #{tpu_custom_call.1} parent=1 // pred_region
      %s42 = ssub.s32 2048, 2048
      %43 = vsyncadd [#allocation8], %s42
      %s44 = sshll.u32 [#allocation9], 4
      %s45 = int_to_ptr.vmem [resolvable:$true] %s44
      %50 = dma.hbm_to_vmem [thread:$0]  %s2, 2048, %s45, [#allocation8], 64, 64, 4
    $region13: #{tpu_custom_call.1} parent=1 // pred_fallthru
      _
    // Predicated region
    $region14: #{tpu_custom_call.1} parent=1 // pred_check
      _
    $region15: #{tpu_custom_call.1} parent=1 // pred_check_branch
      %52 = sbr.rel (0) target = $region17
    $region16: #{tpu_custom_call.1} parent=1 // pred_region
      _
    $region17: #{tpu_custom_call.1} parent=1 // pred_fallthru
      _
    // Predicated region
    $region18: #{tpu_custom_call.1} parent=1 // pred_check
      _
    $region19: #{tpu_custom_call.1} parent=1 // pred_check_branch
      %54 = sbr.rel (0) target = $region21
    $region20: #{tpu_custom_call.1} parent=1 // pred_region
      _
    $region21: #{tpu_custom_call.1} parent=1 // pred_fallthru
      _
    // Predicated region
    $region22: #{tpu_custom_call.1} parent=1 // pred_check
      _
    $region23: #{tpu_custom_call.1} parent=1 // pred_check_branch
      %56 = sbr.rel (0) target = $region25
    $region24: #{tpu_custom_call.1} parent=1 // pred_region
      _
    $region25: #{tpu_custom_call.1} parent=1 // pred_fallthru
      _
    // Predicated region
    $region26: #{tpu_custom_call.1} parent=1 // pred_check
      _
    $region27: #{tpu_custom_call.1} parent=1 // pred_check_branch
      %58 = sbr.rel (0) target = $region29
    $region28: #{tpu_custom_call.1} parent=1 // pred_region
      %59 = dma.done [#allocation5], 128
    $region29: #{tpu_custom_call.1} parent=1 // pred_fallthru
      _
    // Predicated region
    $region30: #{tpu_custom_call.1} parent=1 // pred_check
      _
    $region31: #{tpu_custom_call.1} parent=1 // pred_check_branch
      %61 = sbr.rel (0) target = $region33
    $region32: #{tpu_custom_call.1} parent=1 // pred_region
      %62 = dma.done [#allocation8], 256
    $region33: #{tpu_custom_call.1} parent=1 // pred_fallthru
      _
    // Predicated region
    $region34: #{tpu_custom_call.1} parent=1 // pred_check
      _
    $region35: #{tpu_custom_call.1} parent=1 // pred_check_branch
      %64 = sbr.rel (0) target = $region37
    $region36: #{tpu_custom_call.1} parent=1 // pred_region
      %65 = dma.done [#allocation8], 2048
    $region37: #{tpu_custom_call.1} parent=1 // pred_fallthru
      _
    %v67 = vld [vmem:[#allocation4] sm:$0xf]
    %v68 = vld [vmem:[#allocation4 + $0x4] sm:$0xf]
    %v69 = vld [vmem:[#allocation7] sm:$0xff]
    %v70 = vld [vmem:[#allocation7 + $0x8] sm:$0xff]
    %v71 = vld [vmem:[%s3] sm:$0x1]
    %v72 = vpack.c.bf16 %v70, %v69
    %v75 = vunpack.c.l.b16 %v67
    %v76 = vunpack.c.l.b16 %v68
    %v77 = vpack.c.b16 %v76, %v75
    %vm78 = vcmask 130048
    %v80 = vsel %vm78, %v77, 0
    %82 = vmatprep.subr.bf16.mxu0 0
    %83 = vmatpush1.bf16.msra.mxu0 %v72
    %84 = vmatprep.subr.bf16.mxu0 0
    %85 = vmatpush1.bf16.msra.mxu0 0
    %86 = vmatprep.subr.bf16.mxu0 0
    %87 = vmatpush1.bf16.msra.mxu0 0
    %88 = vmatprep.subr.bf16.mxu0 0
    %89 = vmatpush1.bf16.msra.mxu0 0
    %90 = vmatprep.subr.bf16.mxu0 0
    %91 = vmatpush1.bf16.msra.mxu0 0
    %92 = vmatprep.subr.bf16.mxu0 0
    %93 = vmatpush1.bf16.msra.mxu0 0
    %94 = vmatprep.subr.bf16.mxu0 0
    %95 = vmatpush1.bf16.msra.mxu0 0
    %96 = vmatprep.subr.bf16.mxu0 0
    %97 = vmatpush1.bf16.msra.mxu0 0
    %98 = vmatprep.subr.bf16.mxu0 0
    %99 = vmatpush1.bf16.msra.mxu0 0
    %100 = vmatprep.subr.bf16.mxu0 0
    %101 = vmatpush1.bf16.msra.mxu0 0
    %102 = vmatprep.subr.bf16.mxu0 0
    %103 = vmatpush1.bf16.msra.mxu0 0
    %104 = vmatprep.subr.bf16.mxu0 0
    %105 = vmatpush1.bf16.msra.mxu0 0
    %106 = vmatprep.subr.bf16.mxu0 0
    %107 = vmatpush1.bf16.msra.mxu0 0
    %108 = vmatprep.subr.bf16.mxu0 0
    %109 = vmatpush1.bf16.msra.mxu0 0
    %110 = vmatprep.subr.bf16.mxu0 0
    %111 = vmatpush1.bf16.msra.mxu0 0
    %112 = vmatprep.subr.bf16.mxu0 0
    %113 = vmatpush1.bf16.msra.mxu0 0
    %114 = vmatprep.mubr.bf16.mxu0 0
    %115 = vmatmul.mubr.bf16.gmra.mrb[0].mxu0 %v80
    %v116 = vpop.f32.mrb[0].mxu0
    %v117 = vadd.f32 0.0, %v116
    %v118 = vpop.f32.mrb[0].mxu0
    %v119 = vpop.f32.mrb[0].mxu0
    %v120 = vadd.f32 0.0, %v119
    %v121 = vpop.f32.mrb[0].mxu0
    %122 = vdwg.mxu0
    %v123 = vpack.c.bf16 %v120, %v117
    %vm124 = vcmask 261120
    %125 = vst.msk [vmem:[#allocation2] sm:$0xff] %vm124, %v123
    %127 = vrot.lane.b32.xlu0 %v72, 32
    %v128 = vpop.permute.xlu0 %127
    %vm130 = vcmask 523520
    %131 = vst.msk [vmem:[#allocation2] sm:$0xff] %vm130, %v128
    %v132 = vld [vmem:[#allocation2] sm:$0xff]
    %v133 = vld [vmem:[#allocation9] sm:$0xf]
    %v134 = vld [vmem:[#allocation9 + $0x4] sm:$0xf]
    %v135 = vld [vmem:[#allocation9 + $0x8] sm:$0xf]
    %v136 = vld [vmem:[#allocation9 + $0xc] sm:$0xf]
    %v137 = vld [vmem:[#allocation9 + $0x10] sm:$0xf]
    %v138 = vld [vmem:[#allocation9 + $0x14] sm:$0xf]
    %v139 = vld [vmem:[#allocation9 + $0x18] sm:$0xf]
    %v140 = vld [vmem:[#allocation9 + $0x1c] sm:$0xf]
    %v142 = vlaneseq
    %v143 = vshrl.u32 %v142, 7
    %v144 = vsub.s32 0, %v143
    %v145 = vrot.slane %v71, %v144
    %v155 = vunpack.c.l.b16 %v133
    %v156 = vunpack.c.l.b16 %v134
    %v157 = vunpack.c.l.b16 %v135
    %v158 = vunpack.c.l.b16 %v136
    %v159 = vunpack.c.l.b16 %v137
    %v160 = vunpack.c.l.b16 %v138
    %v161 = vunpack.c.l.b16 %v139
    %v162 = vunpack.c.l.b16 %v140
    %v163 = vpack.c.b16 %v156, %v155
    %v164 = vpack.c.b16 %v158, %v157
    %v165 = vpack.c.b16 %v160, %v159
    %v166 = vpack.c.b16 %v162, %v161
    %vm171 = vcmask 523264
    %v173 = vsel %vm171, %v132, 0
    %175 = vmatprep.subr.bf16.mxu0 0
    %176 = vmatpush1.bf16.msra.mxu0 %v163
    %177 = vmatprep.subr.bf16.mxu0 0
    %178 = vmatpush1.bf16.msra.mxu0 %v164
    %179 = vmatprep.subr.bf16.mxu0 0
    %180 = vmatpush1.bf16.msra.mxu0 %v165
    %181 = vmatprep.subr.bf16.mxu0 0
    %182 = vmatpush1.bf16.msra.mxu0 %v166
    %183 = vmatprep.subr.bf16.mxu0 0
    %184 = vmatpush1.bf16.msra.mxu0 0
    %185 = vmatprep.subr.bf16.mxu0 0
    %186 = vmatpush1.bf16.msra.mxu0 0
    %187 = vmatprep.subr.bf16.mxu0 0
    %188 = vmatpush1.bf16.msra.mxu0 0
    %189 = vmatprep.subr.bf16.mxu0 0
    %190 = vmatpush1.bf16.msra.mxu0 0
    %191 = vmatprep.subr.bf16.mxu0 0
    %192 = vmatpush1.bf16.msra.mxu0 0
    %193 = vmatprep.subr.bf16.mxu0 0
    %194 = vmatpush1.bf16.msra.mxu0 0
    %195 = vmatprep.subr.bf16.mxu0 0
    %196 = vmatpush1.bf16.msra.mxu0 0
    %197 = vmatprep.subr.bf16.mxu0 0
    %198 = vmatpush1.bf16.msra.mxu0 0
    %199 = vmatprep.subr.bf16.mxu0 0
    %200 = vmatpush1.bf16.msra.mxu0 0
    %201 = vmatprep.subr.bf16.mxu0 0
    %202 = vmatpush1.bf16.msra.mxu0 0
    %203 = vmatprep.subr.bf16.mxu0 0
    %204 = vmatpush1.bf16.msra.mxu0 0
    %205 = vmatprep.subr.bf16.mxu0 0
    %206 = vmatpush1.bf16.msra.mxu0 0
    %207 = vmatprep.mubr.bf16.mxu0 0
    %208 = vmatmul.mubr.bf16.gmra.mrb[0].mxu0 %v173
    %v209 = vpop.f32.mrb[0].mxu0
    %v210 = vadd.f32 %v145, %v209
    %v211 = vpop.f32.mrb[0].mxu0
    %v212 = vpop.f32.mrb[0].mxu0
    %v213 = vadd.f32 %v145, %v212
    %v214 = vpop.f32.mrb[0].mxu0
    %215 = vdwg.mxu0
    %v216 = vxor.u32 %v210, 2147483648
    %v217 = vxor.u32 %v213, 2147483648
    %v218 = vmul.f32 %v216, 1.442695
    %v219 = vpow.pop %v218
    %v220 = vmul.f32 %v217, 1.442695
    %v221 = vpow.pop %v220
    %v222 = vadd.f32 %v219, 1.0
    %v223 = vadd.f32 %v221, 1.0
    %v224 = vrcp.pop %v222
    %v225 = vmul.f32 1.0, %v224
    %v226 = vrcp.pop %v223
    %v227 = vmul.f32 1.0, %v226
    %230 = vrot.lane.b32.xlu0 %v210, 32
    %v231 = vpop.permute.xlu0 %230
    %232 = vrot.lane.b32.xlu0 %v213, 32
    %v233 = vpop.permute.xlu0 %232
    %v236 = vmul.f32 %v225, %v231
    %v237 = vmul.f32 %v227, %v233
    %240 = vrot.lane.b32.xlu0 %v236, 64
    %v241 = vpop.permute.xlu0 %240
    %242 = vrot.lane.b32.xlu0 %v237, 64
    %v243 = vpop.permute.xlu0 %242
    %v246 = vadd.f32 %v210, %v241
    %v247 = vadd.f32 %v213, %v243
    %v248 = vtanh.pop %v246
    %v249 = vtanh.pop %v247
    %v250 = vsub.f32 1.0, %v225
    %v251 = vsub.f32 1.0, %v227
    %254 = vrot.lane.b32.xlu0 %v248, 96
    %v255 = vpop.permute.xlu0 %254
    %256 = vrot.lane.b32.xlu0 %v249, 96
    %v257 = vpop.permute.xlu0 %256
    %v260 = vmul.f32 %v250, %v255
    %v261 = vmul.f32 %v251, %v257
    %264 = vrot.lane.b32.xlu0 %v69, 32
    %v265 = vpop.permute.xlu0 %264
    %266 = vrot.lane.b32.xlu0 %v70, 32
    %v267 = vpop.permute.xlu0 %266
    %v270 = vmul.f32 %v225, %v265
    %v271 = vmul.f32 %v227, %v267
    %v272 = vadd.f32 %v260, %v270
    %v273 = vadd.f32 %v261, %v271
    %v274 = vpack.c.bf16 %v273, %v272
    %276 = vrot.lane.b32.xlu0 %v274, 96
    %v277 = vpop.permute.xlu0 %276
    %279 = vmatprep.subr.bf16.mxu0 0
    %280 = vmatpush1.bf16.msra.mxu0 %v277
    %281 = vmatprep.subr.bf16.mxu0 0
    %282 = vmatpush1.bf16.msra.mxu0 0
    %283 = vmatprep.subr.bf16.mxu0 0
    %284 = vmatpush1.bf16.msra.mxu0 0
    %285 = vmatprep.subr.bf16.mxu0 0
    %286 = vmatpush1.bf16.msra.mxu0 0
    %287 = vmatprep.subr.bf16.mxu0 0
    %288 = vmatpush1.bf16.msra.mxu0 0
    %289 = vmatprep.subr.bf16.mxu0 0
    %290 = vmatpush1.bf16.msra.mxu0 0
    %291 = vmatprep.subr.bf16.mxu0 0
    %292 = vmatpush1.bf16.msra.mxu0 0
    %293 = vmatprep.subr.bf16.mxu0 0
    %294 = vmatpush1.bf16.msra.mxu0 0
    %295 = vmatprep.subr.bf16.mxu0 0
    %296 = vmatpush1.bf16.msra.mxu0 0
    %297 = vmatprep.subr.bf16.mxu0 0
    %298 = vmatpush1.bf16.msra.mxu0 0
    %299 = vmatprep.subr.bf16.mxu0 0
    %300 = vmatpush1.bf16.msra.mxu0 0
    %301 = vmatprep.subr.bf16.mxu0 0
    %302 = vmatpush1.bf16.msra.mxu0 0
    %303 = vmatprep.subr.bf16.mxu0 0
    %304 = vmatpush1.bf16.msra.mxu0 0
    %305 = vmatprep.subr.bf16.mxu0 0
    %306 = vmatpush1.bf16.msra.mxu0 0
    %307 = vmatprep.subr.bf16.mxu0 0
    %308 = vmatpush1.bf16.msra.mxu0 0
    %309 = vmatprep.subr.bf16.mxu0 0
    %310 = vmatpush1.bf16.msra.mxu0 0
    %311 = vmatprep.mubr.bf16.mxu0 0
    %312 = vmatmul.mubr.bf16.gmra.mrb[0].mxu0 %v80
    %v313 = vpop.f32.mrb[0].mxu0
    %v314 = vadd.f32 0.0, %v313
    %v315 = vpop.f32.mrb[0].mxu0
    %v316 = vpop.f32.mrb[0].mxu0
    %v317 = vadd.f32 0.0, %v316
    %v318 = vpop.f32.mrb[0].mxu0
    %319 = vdwg.mxu0
    %v320 = vpack.c.bf16 %v317, %v314
    %321 = vst.msk [vmem:[#allocation2] sm:$0xff] %vm124, %v320
    %322 = vst.msk [vmem:[#allocation2] sm:$0xff] %vm130, %v274
    %v323 = vld [vmem:[#allocation2] sm:$0xff]
    %s324 = scalar_lea.vmem [#allocation9], 32
    %v325 = vld [vmem:[%s324] sm:$0xf]
    %v326 = vld [vmem:[%s324 + $0x4] sm:$0xf]
    %v327 = vld [vmem:[%s324 + $0x8] sm:$0xf]
    %v328 = vld [vmem:[%s324 + $0xc] sm:$0xf]
    %v329 = vld [vmem:[%s324 + $0x10] sm:$0xf]
    %v330 = vld [vmem:[%s324 + $0x14] sm:$0xf]
    %v331 = vld [vmem:[%s324 + $0x18] sm:$0xf]
    %v332 = vld [vmem:[%s324 + $0x1c] sm:$0xf]
    %v341 = vunpack.c.l.b16 %v325
    %v342 = vunpack.c.l.b16 %v326
    %v343 = vunpack.c.l.b16 %v327
    %v344 = vunpack.c.l.b16 %v328
    %v345 = vunpack.c.l.b16 %v329
    %v346 = vunpack.c.l.b16 %v330
    %v347 = vunpack.c.l.b16 %v331
    %v348 = vunpack.c.l.b16 %v332
    %v349 = vpack.c.b16 %v342, %v341
    %v350 = vpack.c.b16 %v344, %v343
    %v351 = vpack.c.b16 %v346, %v345
    %v352 = vpack.c.b16 %v348, %v347
    %v358 = vsel %vm171, %v323, 0
    %360 = vmatprep.subr.bf16.mxu0 0
    %361 = vmatpush1.bf16.msra.mxu0 %v349
    %362 = vmatprep.subr.bf16.mxu0 0
    %363 = vmatpush1.bf16.msra.mxu0 %v350
    %364 = vmatprep.subr.bf16.mxu0 0
    %365 = vmatpush1.bf16.msra.mxu0 %v351
    %366 = vmatprep.subr.bf16.mxu0 0
    %367 = vmatpush1.bf16.msra.mxu0 %v352
    %368 = vmatprep.subr.bf16.mxu0 0
    %369 = vmatpush1.bf16.msra.mxu0 0
    %370 = vmatprep.subr.bf16.mxu0 0
    %371 = vmatpush1.bf16.msra.mxu0 0
    %372 = vmatprep.subr.bf16.mxu0 0
    %373 = vmatpush1.bf16.msra.mxu0 0
    %374 = vmatprep.subr.bf16.mxu0 0
    %375 = vmatpush1.bf16.msra.mxu0 0
    %376 = vmatprep.subr.bf16.mxu0 0
    %377 = vmatpush1.bf16.msra.mxu0 0
    %378 = vmatprep.subr.bf16.mxu0 0
    %379 = vmatpush1.bf16.msra.mxu0 0
    %380 = vmatprep.subr.bf16.mxu0 0
    %381 = vmatpush1.bf16.msra.mxu0 0
    %382 = vmatprep.subr.bf16.mxu0 0
    %383 = vmatpush1.bf16.msra.mxu0 0
    %384 = vmatprep.subr.bf16.mxu0 0
    %385 = vmatpush1.bf16.msra.mxu0 0
    %386 = vmatprep.subr.bf16.mxu0 0
    %387 = vmatpush1.bf16.msra.mxu0 0
    %388 = vmatprep.subr.bf16.mxu0 0
    %389 = vmatpush1.bf16.msra.mxu0 0
    %390 = vmatprep.subr.bf16.mxu0 0
    %391 = vmatpush1.bf16.msra.mxu0 0
    %392 = vmatprep.mubr.bf16.mxu0 0
    %393 = vmatmul.mubr.bf16.gmra.mrb[0].mxu0 %v358
    %v394 = vpop.f32.mrb[0].mxu0
    %v395 = vadd.f32 %v145, %v394
    %v396 = vpop.f32.mrb[0].mxu0
    %v397 = vpop.f32.mrb[0].mxu0
    %v398 = vadd.f32 %v145, %v397
    %v399 = vpop.f32.mrb[0].mxu0
    %400 = vdwg.mxu0
    %v401 = vxor.u32 %v395, 2147483648
    %v402 = vxor.u32 %v398, 2147483648
    %v403 = vmul.f32 %v401, 1.442695
    %v404 = vpow.pop %v403
    %v405 = vmul.f32 %v402, 1.442695
    %v406 = vpow.pop %v405
    %v407 = vadd.f32 %v404, 1.0
    %v408 = vadd.f32 %v406, 1.0
    %v409 = vrcp.pop %v407
    %v410 = vmul.f32 1.0, %v409
    %v411 = vrcp.pop %v408
    %v412 = vmul.f32 1.0, %v411
    %415 = vrot.lane.b32.xlu0 %v395, 32
    %v416 = vpop.permute.xlu0 %415
    %417 = vrot.lane.b32.xlu0 %v398, 32
    %v418 = vpop.permute.xlu0 %417
    %v421 = vmul.f32 %v410, %v416
    %v422 = vmul.f32 %v412, %v418
    %425 = vrot.lane.b32.xlu0 %v421, 64
    %v426 = vpop.permute.xlu0 %425
    %427 = vrot.lane.b32.xlu0 %v422, 64
    %v428 = vpop.permute.xlu0 %427
    %v431 = vadd.f32 %v395, %v426
    %v432 = vadd.f32 %v398, %v428
    %v433 = vtanh.pop %v431
    %v434 = vtanh.pop %v432
    %v435 = vsub.f32 1.0, %v410
    %v436 = vsub.f32 1.0, %v412
    %439 = vrot.lane.b32.xlu0 %v433, 96
    %v440 = vpop.permute.xlu0 %439
    %441 = vrot.lane.b32.xlu0 %v434, 96
    %v442 = vpop.permute.xlu0 %441
    %v445 = vmul.f32 %v435, %v440
    %v446 = vmul.f32 %v436, %v442
    %v447 = vmul.f32 %v410, %v272
    %v448 = vmul.f32 %v412, %v273
    %v449 = vadd.f32 %v445, %v447
    %v450 = vadd.f32 %v446, %v448
    %v451 = vpack.c.bf16 %v450, %v449
    %453 = vrot.lane.b32.xlu0 %v451, 96
    %v454 = vpop.permute.xlu0 %453
    %456 = vmatprep.subr.bf16.mxu0 0
    %457 = vmatpush1.bf16.msra.mxu0 %v454
    %458 = vmatprep.subr.bf16.mxu0 0
    %459 = vmatpush1.bf16.msra.mxu0 0
    %460 = vmatprep.subr.bf16.mxu0 0
    %461 = vmatpush1.bf16.msra.mxu0 0
    %462 = vmatprep.subr.bf16.mxu0 0
    %463 = vmatpush1.bf16.msra.mxu0 0
    %464 = vmatprep.subr.bf16.mxu0 0
    %465 = vmatpush1.bf16.msra.mxu0 0
    %466 = vmatprep.subr.bf16.mxu0 0
    %467 = vmatpush1.bf16.msra.mxu0 0
    %468 = vmatprep.subr.bf16.mxu0 0
    %469 = vmatpush1.bf16.msra.mxu0 0
    %470 = vmatprep.subr.bf16.mxu0 0
    %471 = vmatpush1.bf16.msra.mxu0 0
    %472 = vmatprep.subr.bf16.mxu0 0
    %473 = vmatpush1.bf16.msra.mxu0 0
    %474 = vmatprep.subr.bf16.mxu0 0
    %475 = vmatpush1.bf16.msra.mxu0 0
    %476 = vmatprep.subr.bf16.mxu0 0
    %477 = vmatpush1.bf16.msra.mxu0 0
    %478 = vmatprep.subr.bf16.mxu0 0
    %479 = vmatpush1.bf16.msra.mxu0 0
    %480 = vmatprep.subr.bf16.mxu0 0
    %481 = vmatpush1.bf16.msra.mxu0 0
    %482 = vmatprep.subr.bf16.mxu0 0
    %483 = vmatpush1.bf16.msra.mxu0 0
    %484 = vmatprep.subr.bf16.mxu0 0
    %485 = vmatpush1.bf16.msra.mxu0 0
    %486 = vmatprep.subr.bf16.mxu0 0
    %487 = vmatpush1.bf16.msra.mxu0 0
    %488 = vmatprep.mubr.bf16.mxu0 0
    %489 = vmatmul.mubr.bf16.gmra.mrb[0].mxu0 %v80
    %v490 = vpop.f32.mrb[0].mxu0
    %v491 = vadd.f32 0.0, %v490
    %v492 = vpop.f32.mrb[0].mxu0
    %v493 = vpop.f32.mrb[0].mxu0
    %v494 = vadd.f32 0.0, %v493
    %v495 = vpop.f32.mrb[0].mxu0
    %496 = vdwg.mxu0
    %v497 = vpack.c.bf16 %v494, %v491
    %498 = vst.msk [vmem:[#allocation2] sm:$0xff] %vm124, %v497
    %499 = vst.msk [vmem:[#allocation2] sm:$0xff] %vm130, %v451
    %v500 = vld [vmem:[#allocation2] sm:$0xff]
    %s501 = scalar_lea.vmem [#allocation9], 64
    %v502 = vld [vmem:[%s501] sm:$0xf]
    %v503 = vld [vmem:[%s501 + $0x4] sm:$0xf]
    %v504 = vld [vmem:[%s501 + $0x8] sm:$0xf]
    %v505 = vld [vmem:[%s501 + $0xc] sm:$0xf]
    %v506 = vld [vmem:[%s501 + $0x10] sm:$0xf]
    %v507 = vld [vmem:[%s501 + $0x14] sm:$0xf]
    %v508 = vld [vmem:[%s501 + $0x18] sm:$0xf]
    %v509 = vld [vmem:[%s501 + $0x1c] sm:$0xf]
    %v518 = vunpack.c.l.b16 %v502
    %v519 = vunpack.c.l.b16 %v503
    %v520 = vunpack.c.l.b16 %v504
    %v521 = vunpack.c.l.b16 %v505
    %v522 = vunpack.c.l.b16 %v506
    %v523 = vunpack.c.l.b16 %v507
    %v524 = vunpack.c.l.b16 %v508
    %v525 = vunpack.c.l.b16 %v509
    %v526 = vpack.c.b16 %v519, %v518
    %v527 = vpack.c.b16 %v521, %v520
    %v528 = vpack.c.b16 %v523, %v522
    %v529 = vpack.c.b16 %v525, %v524
    %v535 = vsel %vm171, %v500, 0
    %537 = vmatprep.subr.bf16.mxu0 0
    %538 = vmatpush1.bf16.msra.mxu0 %v526
    %539 = vmatprep.subr.bf16.mxu0 0
    %540 = vmatpush1.bf16.msra.mxu0 %v527
    %541 = vmatprep.subr.bf16.mxu0 0
    %542 = vmatpush1.bf16.msra.mxu0 %v528
    %543 = vmatprep.subr.bf16.mxu0 0
    %544 = vmatpush1.bf16.msra.mxu0 %v529
    %545 = vmatprep.subr.bf16.mxu0 0
    %546 = vmatpush1.bf16.msra.mxu0 0
    %547 = vmatprep.subr.bf16.mxu0 0
    %548 = vmatpush1.bf16.msra.mxu0 0
    %549 = vmatprep.subr.bf16.mxu0 0
    %550 = vmatpush1.bf16.msra.mxu0 0
    %551 = vmatprep.subr.bf16.mxu0 0
    %552 = vmatpush1.bf16.msra.mxu0 0
    %553 = vmatprep.subr.bf16.mxu0 0
    %554 = vmatpush1.bf16.msra.mxu0 0
    %555 = vmatprep.subr.bf16.mxu0 0
    %556 = vmatpush1.bf16.msra.mxu0 0
    %557 = vmatprep.subr.bf16.mxu0 0
    %558 = vmatpush1.bf16.msra.mxu0 0
    %559 = vmatprep.subr.bf16.mxu0 0
    %560 = vmatpush1.bf16.msra.mxu0 0
    %561 = vmatprep.subr.bf16.mxu0 0
    %562 = vmatpush1.bf16.msra.mxu0 0
    %563 = vmatprep.subr.bf16.mxu0 0
    %564 = vmatpush1.bf16.msra.mxu0 0
    %565 = vmatprep.subr.bf16.mxu0 0
    %566 = vmatpush1.bf16.msra.mxu0 0
    %567 = vmatprep.subr.bf16.mxu0 0
    %568 = vmatpush1.bf16.msra.mxu0 0
    %569 = vmatprep.mubr.bf16.mxu0 0
    %570 = vmatmul.mubr.bf16.gmra.mrb[0].mxu0 %v535
    %v571 = vpop.f32.mrb[0].mxu0
    %v572 = vadd.f32 %v145, %v571
    %v573 = vpop.f32.mrb[0].mxu0
    %v574 = vpop.f32.mrb[0].mxu0
    %v575 = vadd.f32 %v145, %v574
    %v576 = vpop.f32.mrb[0].mxu0
    %577 = vdwg.mxu0
    %v578 = vxor.u32 %v572, 2147483648
    %v579 = vxor.u32 %v575, 2147483648
    %v580 = vmul.f32 %v578, 1.442695
    %v581 = vpow.pop %v580
    %v582 = vmul.f32 %v579, 1.442695
    %v583 = vpow.pop %v582
    %v584 = vadd.f32 %v581, 1.0
    %v585 = vadd.f32 %v583, 1.0
    %v586 = vrcp.pop %v584
    %v587 = vmul.f32 1.0, %v586
    %v588 = vrcp.pop %v585
    %v589 = vmul.f32 1.0, %v588
    %592 = vrot.lane.b32.xlu0 %v572, 32
    %v593 = vpop.permute.xlu0 %592
    %594 = vrot.lane.b32.xlu0 %v575, 32
    %v595 = vpop.permute.xlu0 %594
    %v598 = vmul.f32 %v587, %v593
    %v599 = vmul.f32 %v589, %v595
    %602 = vrot.lane.b32.xlu0 %v598, 64
    %v603 = vpop.permute.xlu0 %602
    %604 = vrot.lane.b32.xlu0 %v599, 64
    %v605 = vpop.permute.xlu0 %604
    %v608 = vadd.f32 %v572, %v603
    %v609 = vadd.f32 %v575, %v605
    %v610 = vtanh.pop %v608
    %v611 = vtanh.pop %v609
    %v612 = vsub.f32 1.0, %v587
    %v613 = vsub.f32 1.0, %v589
    %616 = vrot.lane.b32.xlu0 %v610, 96
    %v617 = vpop.permute.xlu0 %616
    %618 = vrot.lane.b32.xlu0 %v611, 96
    %v619 = vpop.permute.xlu0 %618
    %v622 = vmul.f32 %v612, %v617
    %v623 = vmul.f32 %v613, %v619
    %v624 = vmul.f32 %v587, %v449
    %v625 = vmul.f32 %v589, %v450
    %v626 = vadd.f32 %v622, %v624
    %v627 = vadd.f32 %v623, %v625
    %v628 = vpack.c.bf16 %v627, %v626
    %630 = vrot.lane.b32.xlu0 %v628, 96
    %v631 = vpop.permute.xlu0 %630
    %633 = vmatprep.subr.bf16.mxu0 0
    %634 = vmatpush1.bf16.msra.mxu0 %v631
    %635 = vmatprep.subr.bf16.mxu0 0
    %636 = vmatpush1.bf16.msra.mxu0 0
    %637 = vmatprep.subr.bf16.mxu0 0
    %638 = vmatpush1.bf16.msra.mxu0 0
    %639 = vmatprep.subr.bf16.mxu0 0
    %640 = vmatpush1.bf16.msra.mxu0 0
    %641 = vmatprep.subr.bf16.mxu0 0
    %642 = vmatpush1.bf16.msra.mxu0 0
    %643 = vmatprep.subr.bf16.mxu0 0
    %644 = vmatpush1.bf16.msra.mxu0 0
    %645 = vmatprep.subr.bf16.mxu0 0
    %646 = vmatpush1.bf16.msra.mxu0 0
    %647 = vmatprep.subr.bf16.mxu0 0
    %648 = vmatpush1.bf16.msra.mxu0 0
    %649 = vmatprep.subr.bf16.mxu0 0
    %650 = vmatpush1.bf16.msra.mxu0 0
    %651 = vmatprep.subr.bf16.mxu0 0
    %652 = vmatpush1.bf16.msra.mxu0 0
    %653 = vmatprep.subr.bf16.mxu0 0
    %654 = vmatpush1.bf16.msra.mxu0 0
    %655 = vmatprep.subr.bf16.mxu0 0
    %656 = vmatpush1.bf16.msra.mxu0 0
    %657 = vmatprep.subr.bf16.mxu0 0
    %658 = vmatpush1.bf16.msra.mxu0 0
    %659 = vmatprep.subr.bf16.mxu0 0
    %660 = vmatpush1.bf16.msra.mxu0 0
    %661 = vmatprep.subr.bf16.mxu0 0
    %662 = vmatpush1.bf16.msra.mxu0 0
    %663 = vmatprep.subr.bf16.mxu0 0
    %664 = vmatpush1.bf16.msra.mxu0 0
    %665 = vmatprep.mubr.bf16.mxu0 0
    %666 = vmatmul.mubr.bf16.gmra.mrb[0].mxu0 %v80
    %v667 = vpop.f32.mrb[0].mxu0
    %v668 = vadd.f32 0.0, %v667
    %v669 = vpop.f32.mrb[0].mxu0
    %v670 = vpop.f32.mrb[0].mxu0
    %v671 = vadd.f32 0.0, %v670
    %v672 = vpop.f32.mrb[0].mxu0
    %673 = vdwg.mxu0
    %v674 = vpack.c.bf16 %v671, %v668
    %675 = vst.msk [vmem:[#allocation2] sm:$0xff] %vm124, %v674
    %676 = vst.msk [vmem:[#allocation2] sm:$0xff] %vm130, %v628
    %v677 = vld [vmem:[#allocation2] sm:$0xff]
    %s678 = scalar_lea.vmem [#allocation9], 96
    %v679 = vld [vmem:[%s678] sm:$0xf]
    %v680 = vld [vmem:[%s678 + $0x4] sm:$0xf]
    %v681 = vld [vmem:[%s678 + $0x8] sm:$0xf]
    %v682 = vld [vmem:[%s678 + $0xc] sm:$0xf]
    %v683 = vld [vmem:[%s678 + $0x10] sm:$0xf]
    %v684 = vld [vmem:[%s678 + $0x14] sm:$0xf]
    %v685 = vld [vmem:[%s678 + $0x18] sm:$0xf]
    %v686 = vld [vmem:[%s678 + $0x1c] sm:$0xf]
    %v695 = vunpack.c.l.b16 %v679
    %v696 = vunpack.c.l.b16 %v680
    %v697 = vunpack.c.l.b16 %v681
    %v698 = vunpack.c.l.b16 %v682
    %v699 = vunpack.c.l.b16 %v683
    %v700 = vunpack.c.l.b16 %v684
    %v701 = vunpack.c.l.b16 %v685
    %v702 = vunpack.c.l.b16 %v686
    %v703 = vpack.c.b16 %v696, %v695
    %v704 = vpack.c.b16 %v698, %v697
    %v705 = vpack.c.b16 %v700, %v699
    %v706 = vpack.c.b16 %v702, %v701
    %v712 = vsel %vm171, %v677, 0
    %714 = vmatprep.subr.bf16.mxu0 0
    %715 = vmatpush1.bf16.msra.mxu0 %v703
    %716 = vmatprep.subr.bf16.mxu0 0
    %717 = vmatpush1.bf16.msra.mxu0 %v704
    %718 = vmatprep.subr.bf16.mxu0 0
    %719 = vmatpush1.bf16.msra.mxu0 %v705
    %720 = vmatprep.subr.bf16.mxu0 0
    %721 = vmatpush1.bf16.msra.mxu0 %v706
    %722 = vmatprep.subr.bf16.mxu0 0
    %723 = vmatpush1.bf16.msra.mxu0 0
    %724 = vmatprep.subr.bf16.mxu0 0
    %725 = vmatpush1.bf16.msra.mxu0 0
    %726 = vmatprep.subr.bf16.mxu0 0
    %727 = vmatpush1.bf16.msra.mxu0 0
    %728 = vmatprep.subr.bf16.mxu0 0
    %729 = vmatpush1.bf16.msra.mxu0 0
    %730 = vmatprep.subr.bf16.mxu0 0
    %731 = vmatpush1.bf16.msra.mxu0 0
    %732 = vmatprep.subr.bf16.mxu0 0
    %733 = vmatpush1.bf16.msra.mxu0 0
    %734 = vmatprep.subr.bf16.mxu0 0
    %735 = vmatpush1.bf16.msra.mxu0 0
    %736 = vmatprep.subr.bf16.mxu0 0
    %737 = vmatpush1.bf16.msra.mxu0 0
    %738 = vmatprep.subr.bf16.mxu0 0
    %739 = vmatpush1.bf16.msra.mxu0 0
    %740 = vmatprep.subr.bf16.mxu0 0
    %741 = vmatpush1.bf16.msra.mxu0 0
    %742 = vmatprep.subr.bf16.mxu0 0
    %743 = vmatpush1.bf16.msra.mxu0 0
    %744 = vmatprep.subr.bf16.mxu0 0
    %745 = vmatpush1.bf16.msra.mxu0 0
    %746 = vmatprep.mubr.bf16.mxu0 0
    %747 = vmatmul.mubr.bf16.gmra.mrb[0].mxu0 %v712
    %v748 = vpop.f32.mrb[0].mxu0
    %v749 = vadd.f32 %v145, %v748
    %v750 = vpop.f32.mrb[0].mxu0
    %v751 = vpop.f32.mrb[0].mxu0
    %v752 = vadd.f32 %v145, %v751
    %v753 = vpop.f32.mrb[0].mxu0
    %754 = vdwg.mxu0
    %v755 = vxor.u32 %v749, 2147483648
    %v756 = vxor.u32 %v752, 2147483648
    %v757 = vmul.f32 %v755, 1.442695
    %v758 = vpow.pop %v757
    %v759 = vmul.f32 %v756, 1.442695
    %v760 = vpow.pop %v759
    %v761 = vadd.f32 %v758, 1.0
    %v762 = vadd.f32 %v760, 1.0
    %v763 = vrcp.pop %v761
    %v764 = vmul.f32 1.0, %v763
    %v765 = vrcp.pop %v762
    %v766 = vmul.f32 1.0, %v765
    %769 = vrot.lane.b32.xlu0 %v749, 32
    %v770 = vpop.permute.xlu0 %769
    %771 = vrot.lane.b32.xlu0 %v752, 32
    %v772 = vpop.permute.xlu0 %771
    %v775 = vmul.f32 %v764, %v770
    %v776 = vmul.f32 %v766, %v772
    %779 = vrot.lane.b32.xlu0 %v775, 64
    %v780 = vpop.permute.xlu0 %779
    %781 = vrot.lane.b32.xlu0 %v776, 64
    %v782 = vpop.permute.xlu0 %781
    %v785 = vadd.f32 %v749, %v780
    %v786 = vadd.f32 %v752, %v782
    %v787 = vtanh.pop %v785
    %v788 = vtanh.pop %v786
    %v789 = vsub.f32 1.0, %v764
    %v790 = vsub.f32 1.0, %v766
    %793 = vrot.lane.b32.xlu0 %v787, 96
    %v794 = vpop.permute.xlu0 %793
    %795 = vrot.lane.b32.xlu0 %v788, 96
    %v796 = vpop.permute.xlu0 %795
    %v799 = vmul.f32 %v789, %v794
    %v800 = vmul.f32 %v790, %v796
    %v801 = vmul.f32 %v764, %v626
    %v802 = vmul.f32 %v766, %v627
    %v803 = vadd.f32 %v799, %v801
    %v804 = vadd.f32 %v800, %v802
    %v805 = vpack.c.bf16 %v804, %v803
    %v806 = vld [vmem:[%s4] sm:$0x1]
    %s807 = sld [smem:[#allocation3]]
    %v808 = vstv %s807
    %810 = vrot.lane.b32.xlu0 %v805, 96
    %v811 = vpop.permute.xlu0 %810
    %v813 = vsel %vm124, %v806, 0
    %v816 = vsel %vm124, %v811, 0
    %818 = vmatprep.subr.bf16.mxu0 0
    %819 = vmatpush1.bf16.xpose.msra.mxu0 %v816
    %820 = vmatprep.subr.bf16.mxu0 0
    %821 = vmatpush1.bf16.xpose.msra.mxu0 0
    %822 = vmatprep.subr.bf16.mxu0 0
    %823 = vmatpush1.bf16.xpose.msra.mxu0 0
    %824 = vmatprep.subr.bf16.mxu0 0
    %825 = vmatpush1.bf16.xpose.msra.mxu0 0
    %826 = vmatprep.subr.bf16.mxu0 0
    %827 = vmatpush1.bf16.xpose.msra.mxu0 0
    %828 = vmatprep.subr.bf16.mxu0 0
    %829 = vmatpush1.bf16.xpose.msra.mxu0 0
    %830 = vmatprep.subr.bf16.mxu0 0
    %831 = vmatpush1.bf16.xpose.msra.mxu0 0
    %832 = vmatprep.subr.bf16.mxu0 0
    %833 = vmatpush1.bf16.xpose.msra.mxu0 0
    %834 = vmatprep.subr.bf16.mxu0 0
    %835 = vmatpush1.bf16.xpose.msra.mxu0 0
    %836 = vmatprep.subr.bf16.mxu0 0
    %837 = vmatpush1.bf16.xpose.msra.mxu0 0
    %838 = vmatprep.subr.bf16.mxu0 0
    %839 = vmatpush1.bf16.xpose.msra.mxu0 0
    %840 = vmatprep.subr.bf16.mxu0 0
    %841 = vmatpush1.bf16.xpose.msra.mxu0 0
    %842 = vmatprep.subr.bf16.mxu0 0
    %843 = vmatpush1.bf16.xpose.msra.mxu0 0
    %844 = vmatprep.subr.bf16.mxu0 0
    %845 = vmatpush1.bf16.xpose.msra.mxu0 0
    %846 = vmatprep.subr.bf16.mxu0 0
    %847 = vmatpush1.bf16.xpose.msra.mxu0 0
    %848 = vmatprep.subr.bf16.mxu0 0
    %849 = vmatpush1.bf16.xpose.msra.mxu0 0
    %850 = vmatprep.mubr.bf16.mxu0 0
    %851 = vmatmul.mubr.bf16.gmra.mrb[0].mxu0 %v813
    %v852 = vpop.f32.mrb[0].mxu0
    %v853 = vadd.f32 %v808, %v852
    %v854 = vpop.f32.mrb[0].mxu0
    %v855 = vpop.f32.mrb[0].mxu0
    %v856 = vpop.f32.mrb[0].mxu0
    %857 = vdwg.mxu0
    %v858 = vxor.u32 %v853, 2147483648
    %v859 = vmul.f32 %v858, 1.442695
    %v860 = vpow.pop %v859
    %v861 = vadd.f32 %v860, 1.0
    %v862 = vrcp.pop %v861
    %v863 = vmul.f32 1.0, %v862
    %vm864 = vcmask 122880
    %v865 = vsel %vm864, %v863, -inf
    %866 = vmax.xlane.f32.xlu0 %v865
    %v867 = vpop.xlane.xlu0 %866
    %v868 = vsub.f32 %v863, %v867
    %v869 = vmul.f32 %v868, 1.442695
    %v870 = vpow.pop %v869
    %v871 = vsel %vm864, %v870, 0.0
    %872 = vadd.xlane.f32.xlu0 %v871
    %v873 = vpop.xlane.xlu0 %872
    %v874 = vrcp.pop %v873
    %v875 = vmul.f32 %v870, %v874
    %v876 = vpack.c.bf16 %v875, %v875
    %v879 = vsel %vm78, %v876, 0
    %881 = vmatprep.subr.bf16.mxu0 0
    %882 = vmatpush1.bf16.msra.mxu0 %v811
    %883 = vmatprep.subr.bf16.mxu0 0
    %884 = vmatpush1.bf16.msra.mxu0 0
    %885 = vmatprep.subr.bf16.mxu0 0
    %886 = vmatpush1.bf16.msra.mxu0 0
    %887 = vmatprep.subr.bf16.mxu0 0
    %888 = vmatpush1.bf16.msra.mxu0 0
    %889 = vmatprep.subr.bf16.mxu0 0
    %890 = vmatpush1.bf16.msra.mxu0 0
    %891 = vmatprep.subr.bf16.mxu0 0
    %892 = vmatpush1.bf16.msra.mxu0 0
    %893 = vmatprep.subr.bf16.mxu0 0
    %894 = vmatpush1.bf16.msra.mxu0 0
    %895 = vmatprep.subr.bf16.mxu0 0
    %896 = vmatpush1.bf16.msra.mxu0 0
    %897 = vmatprep.subr.bf16.mxu0 0
    %898 = vmatpush1.bf16.msra.mxu0 0
    %899 = vmatprep.subr.bf16.mxu0 0
    %900 = vmatpush1.bf16.msra.mxu0 0
    %901 = vmatprep.subr.bf16.mxu0 0
    %902 = vmatpush1.bf16.msra.mxu0 0
    %903 = vmatprep.subr.bf16.mxu0 0
    %904 = vmatpush1.bf16.msra.mxu0 0
    %905 = vmatprep.subr.bf16.mxu0 0
    %906 = vmatpush1.bf16.msra.mxu0 0
    %907 = vmatprep.subr.bf16.mxu0 0
    %908 = vmatpush1.bf16.msra.mxu0 0
    %909 = vmatprep.subr.bf16.mxu0 0
    %910 = vmatpush1.bf16.msra.mxu0 0
    %911 = vmatprep.subr.bf16.mxu0 0
    %912 = vmatpush1.bf16.msra.mxu0 0
    %913 = vmatprep.mubr.bf16.mxu0 0
    %914 = vmatmul.mubr.bf16.gmra.mrb[0].mxu0 %v879
    %v915 = vpop.f32.mrb[0].mxu0
    %v916 = vadd.f32 0.0, %v915
    %v917 = vpop.f32.mrb[0].mxu0
    %v918 = vpop.f32.mrb[0].mxu0
    %v919 = vpop.f32.mrb[0].mxu0
    %920 = vdwg.mxu0
    %vm921 = vcmask 253952
    %922 = vst.msk [vmem:[#allocation10] sm:$0x1] %vm921, %v916
    // Predicated region
    $region38: #{tpu_custom_call.1} parent=1 // pred_check
      _
    $region39: #{tpu_custom_call.1} parent=1 // pred_check_branch
      %924 = sbr.rel (0) target = $region41
    $region40: #{tpu_custom_call.1} parent=1 // pred_region
      %s926 = ssub.s32 16, 16
      %927 = vsyncadd [#allocation6], %s926
      %s929 = sshll.u32 [#allocation10], 4
      %s930 = int_to_ptr.vmem [resolvable:$true] %s929
      %932 = dma.vmem_to_hbm [thread:$0]  %s930, 16, %s6, [#allocation6]
    $region41: #{tpu_custom_call.1} parent=1 // pred_fallthru
      _
    // Predicated region
    $region42: #{tpu_custom_call.1} parent=1 // pred_check
      _
    $region43: #{tpu_custom_call.1} parent=1 // pred_check_branch
      %934 = sbr.rel (0) target = $region45
    $region44: #{tpu_custom_call.1} parent=1 // pred_region
      %935 = dma.done [#allocation6], 16
    $region45: #{tpu_custom_call.1} parent=1 // pred_fallthru
      _
    %936 = vsyncpa [#allocation5], 1
    %937 = vsyncpa [#allocation8], 1
    %938 = vsyncpa [#allocation6], 1

</llo_original>
